<compile_context>
chip_gen: v5e
topology: v5e:2x2
jax: 0.10.0
libtpu: 0.0.40
codegen_flags: <defaults>
</compile_context>

<pallas_src>
import jax
import jax.numpy as jnp
from jax.experimental import pallas as pl
from jax.experimental.pallas import tpu as pltpu


def _round_up(n: int, m: int) -> int:
    return ((n + m - 1) // m) * m


# ---------------------------------------------------------------------------
# Kernels
# ---------------------------------------------------------------------------
def mlp_resident_kernel(x_ref, w1_ref, b1_ref, w2_ref, b2_ref, o_ref):
    """Fused MLP with weights fully VMEM-resident.

    Operands arrive pre-transposed to (K, N) layout and cast to bf16 in the
    wrapper, so both dots are canonical MXU matmuls with f32 accumulation and
    no in-kernel transposes. Bias + ReLU run in f32 on the VPU (free filler
    under the MXU).
    """
    h = jnp.dot(x_ref[...], w1_ref[...], preferred_element_type=jnp.float32)
    h = jnp.maximum(h + b1_ref[...], 0.0)
    # Dropout(p=0.0) is the identity.
    # TODO(synk): training-mode dropout (p>0) would use pltpu.prng_seed /
    # pltpu.prng_random_bits to build the keep-mask; omitted since p=0.0.
    y = jnp.dot(h.astype(w2_ref.dtype), w2_ref[...],
                preferred_element_type=jnp.float32)
    o_ref[...] = (y + b2_ref[...]).astype(o_ref.dtype)


def mlp_hid_tiled_kernel(x_ref, w1_ref, b1_ref, w2_ref, b2_ref, o_ref, acc_ref):
    """Fallback when (W1 + W2) can't stay VMEM-resident (earliest on v7x).

    Grid = (batch tiles, hidden tiles); the hidden axis is the innermost
    "arbitrary" reduction axis.  Each step builds a ReLU'd hidden slice and
    accumulates its contribution to the output tile in f32 VMEM scratch.
    Zero-padded hidden columns contribute exactly 0 (relu(0+0) @ 0).
    """
    hstep = pl.program_id(1)

    @pl.when(hstep == 0)
    def _():
        acc_ref[...] = jnp.zeros_like(acc_ref)

    h = jnp.dot(x_ref[...], w1_ref[...], preferred_element_type=jnp.float32)
    h = jnp.maximum(h + b1_ref[...], 0.0)
    acc_ref[...] += jnp.dot(h.astype(w2_ref.dtype), w2_ref[...],
                            preferred_element_type=jnp.float32)

    @pl.when(hstep == pl.num_programs(1) - 1)
    def _():
        o_ref[...] = (acc_ref[...] + b2_ref[...]).astype(o_ref.dtype)


# ---------------------------------------------------------------------------
# Wrapper
# ---------------------------------------------------------------------------
def lazy_simple_mlp(x, w1, b1, w2, b2, *, block_b=1024,
                    compute_dtype=jnp.bfloat16,
                    force_hid_tiling=False, hid_tile=None):
    """Forward pass of LazySimpleMLP (dropout p = 0.0).

    x : [B, D_in]                       (output keeps x.dtype)
    w1: [hid, D_in], b1: [hid]          (PyTorch Linear (out, in) layout)
    w2: [out, hid], b2: [out]
    """
    B, Din = x.shape
    hid = w1.shape[0]
    out_dim = w2.shape[0]
    out_dtype = x.dtype
    cdt = jnp.dtype(compute_dtype)
    csz = cdt.itemsize

    # ---- one-time wrapper prep (fused by XLA; amortized over all grid steps)
    # Lane-dense output: pad out_dim up to a multiple of 128 so output stores
    # are unmasked full-lane vst; result is sliced back after the call.
    out_p = _round_up(out_dim, 128)
    xc = x.astype(cdt)
    w1t = w1.T.astype(cdt)                                  # (Din, hid)
    w2t = w2.T.astype(cdt)                                  # (hid, out)
    b1_r = b1.astype(jnp.float32).reshape(1, hid)
    b2_r = b2.astype(jnp.float32).reshape(1, out_dim)
    if out_p != out_dim:
        w2t = jnp.pad(w2t, ((0, 0), (0, out_p - out_dim)))
        b2_r = jnp.pad(b2_r, ((0, 0), (0, out_p - out_dim)))

    # ---- generation-aware VMEM limit (~96 MiB on v5e/v6e, ~48 MiB on v7x)
    try:
        vmem_cap = int(getattr(pltpu.get_tpu_info(), "vmem_capacity_bytes",
                               64 * 1024 * 1024))
    except Exception:
        vmem_cap = 64 * 1024 * 1024
    vmem_limit = max(32 * 1024 * 1024,
                     min(100 * 1024 * 1024, (3 * vmem_cap) // 4))
    budget = (7 * vmem_limit) // 10   # headroom for compiler-internal scratch

    cost = pl.CostEstimate(
        flops=2 * B * (Din * hid + hid * out_dim),
        transcendentals=0,
        bytes_accessed=(B * Din + Din * hid + hid * out_p) * csz
        + (hid + out_p) * 4 + B * out_p * 4,
    )

    # ---- VMEM-fit check for the resident-weights path (assume worst case:
    # default 2-deep buffering on every operand).
    weight_bytes = 2 * ((Din * hid + hid * out_p) * csz + (hid + out_p) * 4)
    per_row = 2 * Din * csz + 2 * out_p * 4 + hid * (4 + csz)
    weights_fit = weight_bytes + 8 * per_row <= budget
    use_resident = weights_fit and not force_hid_tiling

    if use_resident:
        # Batch tile: as large as the VMEM budget allows, capped at block_b,
        # split >=2 ways when possible so v7x's second TensorCore gets work.
        tb_cap = max(8, (((budget - weight_bytes) // per_row) // 8) * 8)
        tb = min(block_b, tb_cap, _round_up(B, 8))
        if B >= 16:
            tb = min(tb, _round_up(pl.cdiv(B, 2), 8))
        tb = max(tb, 8)
        grid_b = pl.cdiv(B, tb)

        def call(single_buffer_weights):
            const = (dict(pipeline_mode=pl.Buffered(1))
                     if single_buffer_weights else {})
            return pl.pallas_call(
                mlp_resident_kernel,
                out_shape=jax.ShapeDtypeStruct((B, out_p), out_dtype),
                grid=(grid_b,),
                in_specs=[
                    # Batch-tiled activation: new block each grid step.
                    pl.BlockSpec((tb, Din), lambda i: (i, 0)),
                    # Weights / biases: constant block -> fetched once,
                    # VMEM-resident (single-buffered when supported).
                    pl.BlockSpec((Din, hid), lambda i: (0, 0), **const),
                    pl.BlockSpec((1, hid), lambda i: (0, 0), **const),
                    pl.BlockSpec((hid, out_p), lambda i: (0, 0), **const),
                    pl.BlockSpec((1, out_p), lambda i: (0, 0), **const),
                ],
                out_specs=pl.BlockSpec((tb, out_p), lambda i: (i, 0)),
                compiler_params=pltpu.CompilerParams(
                    dimension_semantics=("parallel",),
                    vmem_limit_bytes=vmem_limit,
                ),
                cost_estimate=cost,
            )(xc, w1t, b1_r, w2t, b2_r)

        try:
            out = call(True)
        except Exception:
            # TODO(synk): pl.Buffered(1) not accepted by this jax build; fall
            # back to default double-buffered weight blocks (2x weight VMEM).
            out = call(False)
    else:
        # ---- hidden-dim-tiled fallback (weights streamed, f32 accumulator)
        if hid_tile is not None:
            th = max(128, _round_up(hid_tile, 128))
        else:
            th = 128
            for cand in (512, 256):
                w_tile = 2 * ((Din * cand + cand * out_p) * csz + cand * 4)
                if cand <= _round_up(hid, 128) and w_tile <= budget // 2:
                    th = cand
                    break
        hid_p = _round_up(hid, th)
        grid_h = hid_p // th
        if hid_p != hid:
            w1t = jnp.pad(w1t, ((0, 0), (0, hid_p - hid)))
            w2t = jnp.pad(w2t, ((0, hid_p - hid), (0, 0)))
            b1_r = jnp.pad(b1_r, ((0, 0), (0, hid_p - hid)))

        w_tile_bytes = 2 * ((Din * th + th * out_p) * csz + th * 4) + 2 * out_p * 4
        per_row_t = 2 * Din * csz + 3 * out_p * 4 + th * (4 + csz)
        tb_cap = max(8, (((budget - w_tile_bytes) // per_row_t) // 8) * 8)
        tb = min(block_b, tb_cap, _round_up(B, 8))
        if B >= 16:
            tb = min(tb, _round_up(pl.cdiv(B, 2), 8))
        tb = max(tb, 8)
        grid_b = pl.cdiv(B, tb)

        out = pl.pallas_call(
            mlp_hid_tiled_kernel,
            out_shape=jax.ShapeDtypeStruct((B, out_p), out_dtype),
            grid=(grid_b, grid_h),
            in_specs=[
                pl.BlockSpec((tb, Din), lambda i, h: (i, 0)),
                pl.BlockSpec((Din, th), lambda i, h: (0, h)),
                pl.BlockSpec((1, th), lambda i, h: (0, h)),
                pl.BlockSpec((th, out_p), lambda i, h: (h, 0)),
                pl.BlockSpec((1, out_p), lambda i, h: (0, 0)),
            ],
            out_specs=pl.BlockSpec((tb, out_p), lambda i, h: (i, 0)),
            scratch_shapes=[pltpu.VMEM((tb, out_p), jnp.float32)],
            compiler_params=pltpu.CompilerParams(
                dimension_semantics=("parallel", "arbitrary"),
                vmem_limit_bytes=vmem_limit,
            ),
            cost_estimate=cost,
        )(xc, w1t, b1_r, w2t, b2_r)

    return out[:, :out_dim] if out_p != out_dim else out


def reference_mlp(x, w1, b1, w2, b2, compute_dtype=jnp.bfloat16):
    """Pure-JAX reference matching the kernel's numerics (bf16 operands, f32 acc)."""
    xb = x.astype(compute_dtype)
    h = jnp.dot(xb, w1.T.astype(compute_dtype),
                preferred_element_type=jnp.float32) + b1.astype(jnp.float32)
    h = jnp.maximum(h, 0.0)
    y = jnp.dot(h.astype(compute_dtype), w2.T.astype(compute_dtype),
                preferred_element_type=jnp.float32) + b2.astype(jnp.float32)
    return y.astype(x.dtype)


if __name__ == "__main__":
    # --- Small shapes consistent with the module (LazyLinear infers in_dim). ---
    B, IN_DIM, HID_DIM, OUT_DIM = 8, 32, 32, 16
    key = jax.random.PRNGKey(0)
    kx, k1, kb1, k2, kb2 = jax.random.split(key, 5)

    x = jax.random.normal(kx, (B, IN_DIM), dtype=jnp.float32)
    w1 = jax.random.normal(k1, (HID_DIM, IN_DIM), dtype=jnp.float32) * 0.1
    b1 = jax.random.normal(kb1, (HID_DIM,), dtype=jnp.float32) * 0.1
    w2 = jax.random.normal(k2, (OUT_DIM, HID_DIM), dtype=jnp.float32) * 0.1
    b2 = jax.random.normal(kb2, (OUT_DIM,), dtype=jnp.float32) * 0.1

    y = jax.block_until_ready(lazy_simple_mlp(x, w1, b1, w2, b2))
    y_ref = reference_mlp(x, w1, b1, w2, b2)
    assert y.shape == (B, OUT_DIM), y.shape
    assert jnp.allclose(y, y_ref, atol=2e-2, rtol=2e-2), "mismatch (small, resident)"

    # --- Larger, batch-tiled check: grid_b >= 2 (megacore), lane-dense output. ---
    B2, IN2, HID2, OUT2 = 512, 128, 256, 128
    kx2, k12, kb12, k22, kb22 = jax.random.split(jax.random.PRNGKey(1), 5)
    x2 = jax.random.normal(kx2, (B2, IN2), dtype=jnp.float32)
    w12 = jax.random.normal(k12, (HID2, IN2), dtype=jnp.float32) * 0.05
    b12 = jax.random.normal(kb12, (HID2,), dtype=jnp.float32) * 0.05
    w22 = jax.random.normal(k22, (OUT2, HID2), dtype=jnp.float32) * 0.05
    b22 = jax.random.normal(kb22, (OUT2,), dtype=jnp.float32) * 0.05

    y2 = jax.block_until_ready(lazy_simple_mlp(x2, w12, b12, w22, b22))
    y2_ref = reference_mlp(x2, w12, b12, w22, b22)
    assert y2.shape == (B2, OUT2), y2.shape
    assert jnp.allclose(y2, y2_ref, atol=2e-2, rtol=2e-2), "mismatch (tiled resident)"

    # --- Exercise the hidden-tiled fallback path (forced) with padded out_dim. ---
    B3, IN3, HID3, OUT3 = 64, 128, 256, 192
    kx3, k13, kb13, k23, kb23 = jax.random.split(jax.random.PRNGKey(2), 5)
    x3 = jax.random.normal(kx3, (B3, IN3), dtype=jnp.float32)
    w13 = jax.random.normal(k13, (HID3, IN3), dtype=jnp.float32) * 0.05
    b13 = jax.random.normal(kb13, (HID3,), dtype=jnp.float32) * 0.05
    w23 = jax.random.normal(k23, (OUT3, HID3), dtype=jnp.float32) * 0.05
    b23 = jax.random.normal(kb23, (OUT3,), dtype=jnp.float32) * 0.05

    y3 = jax.block_until_ready(
        lazy_simple_mlp(x3, w13, b13, w23, b23,
                        force_hid_tiling=True, hid_tile=128))
    y3_ref = reference_mlp(x3, w13, b13, w23, b23)
    assert y3.shape == (B3, OUT3), y3.shape
    assert jnp.allclose(y3, y3_ref, atol=2e-2, rtol=2e-2), "mismatch (hid-tiled)"

    print("KERNEL_OK")
</pallas_src>

<mosaic_0001>
module attributes {stable_mosaic.version = 11 : i64} {
  func.func @mlp_resident_kernel(%arg0: i32, %arg1: memref<8x32xbf16, #tpu.memory_space<vmem>>, %arg2: memref<32x32xbf16, #tpu.memory_space<vmem>>, %arg3: memref<1x32xf32, #tpu.memory_space<vmem>>, %arg4: memref<32x128xbf16, #tpu.memory_space<vmem>>, %arg5: memref<1x128xf32, #tpu.memory_space<vmem>>, %arg6: memref<8x128xf32, #tpu.memory_space<vmem>>) attributes {dimension_semantics = [#tpu.dimension_semantics<parallel>], iteration_bounds = array<i64: 1>, scalar_prefetch = 0 : i64, scratch_operands = 0 : i64, tpu.core_type = #tpu.core_type<tc>, window_params = [{transform_indices = @transform_0, window_bounds = array<i64: 8, 32>}, {pipeline_mode = #tpu.pipeline_mode<synchronous>, transform_indices = @transform_1, window_bounds = array<i64: 32, 32>}, {pipeline_mode = #tpu.pipeline_mode<synchronous>, transform_indices = @transform_2, window_bounds = array<i64: 1, 32>}, {pipeline_mode = #tpu.pipeline_mode<synchronous>, transform_indices = @transform_3, window_bounds = array<i64: 32, 128>}, {pipeline_mode = #tpu.pipeline_mode<synchronous>, transform_indices = @transform_4, window_bounds = array<i64: 1, 128>}, {transform_indices = @transform_5, window_bounds = array<i64: 8, 128>}]} {
    %c0 = arith.constant 0 : index
    %c0_0 = arith.constant 0 : index
    %0 = vector.load %arg1[%c0, %c0_0] : memref<8x32xbf16, #tpu.memory_space<vmem>>, vector<8x32xbf16>
    %c0_1 = arith.constant 0 : index
    %c0_2 = arith.constant 0 : index
    %1 = vector.load %arg2[%c0_1, %c0_2] : memref<32x32xbf16, #tpu.memory_space<vmem>>, vector<32x32xbf16>
    %cst = arith.constant dense<0.000000e+00> : vector<8x32xf32>
    %2 = tpu.matmul %0, %1, %cst {dimension_numbers = #tpu.dot_dimension_numbers<[1], [0], [0], [1], [0, 0, 1, 1], [], []>} : vector<8x32xbf16>, vector<32x32xbf16>, vector<8x32xf32> -> vector<8x32xf32>
    %c0_3 = arith.constant 0 : index
    %c0_4 = arith.constant 0 : index
    %3 = vector.load %arg3[%c0_3, %c0_4] : memref<1x32xf32, #tpu.memory_space<vmem>>, vector<1x32xf32>
    %4 = vector.broadcast %3 : vector<1x32xf32> to vector<8x32xf32>
    %5 = arith.addf %2, %4 : vector<8x32xf32>
    %cst_5 = arith.constant 0.000000e+00 : f32
    %6 = vector.broadcast %cst_5 : f32 to vector<8x32xf32>
    %7 = arith.maximumf %5, %6 : vector<8x32xf32>
    %8 = arith.truncf %7 : vector<8x32xf32> to vector<8x32xbf16>
    %c0_6 = arith.constant 0 : index
    %c0_7 = arith.constant 0 : index
    %9 = vector.load %arg4[%c0_6, %c0_7] : memref<32x128xbf16, #tpu.memory_space<vmem>>, vector<32x128xbf16>
    %cst_8 = arith.constant dense<0.000000e+00> : vector<8x128xf32>
    %10 = tpu.matmul %8, %9, %cst_8 {dimension_numbers = #tpu.dot_dimension_numbers<[1], [0], [0], [1], [0, 0, 1, 1], [], []>} : vector<8x32xbf16>, vector<32x128xbf16>, vector<8x128xf32> -> vector<8x128xf32>
    %c0_9 = arith.constant 0 : index
    %c0_10 = arith.constant 0 : index
    %11 = vector.load %arg5[%c0_9, %c0_10] : memref<1x128xf32, #tpu.memory_space<vmem>>, vector<1x128xf32>
    %12 = vector.broadcast %11 : vector<1x128xf32> to vector<8x128xf32>
    %13 = arith.addf %10, %12 : vector<8x128xf32>
    %c0_11 = arith.constant 0 : index
    %c0_12 = arith.constant 0 : index
    %14 = vector.load %arg6[%c0_11, %c0_12] : memref<8x128xf32, #tpu.memory_space<vmem>>, vector<8x128xf32>
    tpu.vector_store %arg6[%c0_11, %c0_12], %13 {strides = array<i32>} : memref<8x128xf32, #tpu.memory_space<vmem>>, vector<8x128xf32>,
    return
  }
  func.func @transform_0(%arg0: i32) -> (i32, i32) {
    %c0_i32 = arith.constant 0 : i32
    %c0_i32_0 = arith.constant 0 : i32
    return %arg0, %c0_i32 : i32, i32
  }
  func.func @transform_1(%arg0: i32) -> (i32, i32) {
    %c0_i32 = arith.constant 0 : i32
    %c0_i32_0 = arith.constant 0 : i32
    %c0_i32_1 = arith.constant 0 : i32
    return %c0_i32, %c0_i32_0 : i32, i32
  }
  func.func @transform_2(%arg0: i32) -> (i32, i32) {
    %c0_i32 = arith.constant 0 : i32
    %c0_i32_0 = arith.constant 0 : i32
    %c0_i32_1 = arith.constant 0 : i32
    return %c0_i32, %c0_i32_0 : i32, i32
  }
  func.func @transform_3(%arg0: i32) -> (i32, i32) {
    %c0_i32 = arith.constant 0 : i32
    %c0_i32_0 = arith.constant 0 : i32
    %c0_i32_1 = arith.constant 0 : i32
    return %c0_i32, %c0_i32_0 : i32, i32
  }
  func.func @transform_4(%arg0: i32) -> (i32, i32) {
    %c0_i32 = arith.constant 0 : i32
    %c0_i32_0 = arith.constant 0 : i32
    %c0_i32_1 = arith.constant 0 : i32
    return %c0_i32, %c0_i32_0 : i32, i32
  }
  func.func @transform_5(%arg0: i32) -> (i32, i32) {
    %c0_i32 = arith.constant 0 : i32
    %c0_i32_0 = arith.constant 0 : i32
    return %arg0, %c0_i32 : i32, i32
  }
}

module attributes {stable_mosaic.version = 11 : i64} {
  func.func @mlp_resident_kernel(%arg0: i32, %arg1: memref<8x32xbf16, #tpu.memory_space<vmem>>, %arg2: memref<32x32xbf16, #tpu.memory_space<vmem>>, %arg3: memref<1x32xf32, #tpu.memory_space<vmem>>, %arg4: memref<32x128xbf16, #tpu.memory_space<vmem>>, %arg5: memref<1x128xf32, #tpu.memory_space<vmem>>, %arg6: memref<8x128xf32, #tpu.memory_space<vmem>>) attributes {dimension_semantics = [#tpu.dimension_semantics<parallel>], iteration_bounds = array<i64: 1>, scalar_prefetch = 0 : i64, scratch_operands = 0 : i64, tpu.core_type = #tpu.core_type<tc>, window_params = [{transform_indices = @transform_0, window_bounds = array<i64: 8, 32>}, {pipeline_mode = #tpu.pipeline_mode<synchronous>, transform_indices = @transform_1, window_bounds = array<i64: 32, 32>}, {pipeline_mode = #tpu.pipeline_mode<synchronous>, transform_indices = @transform_2, window_bounds = array<i64: 1, 32>}, {pipeline_mode = #tpu.pipeline_mode<synchronous>, transform_indices = @transform_3, window_bounds = array<i64: 32, 128>}, {pipeline_mode = #tpu.pipeline_mode<synchronous>, transform_indices = @transform_4, window_bounds = array<i64: 1, 128>}, {transform_indices = @transform_5, window_bounds = array<i64: 8, 128>}]} {
    %c0 = arith.constant 0 : index
    %c0_0 = arith.constant 0 : index
    %0 = vector.load %arg1[%c0, %c0_0] : memref<8x32xbf16, #tpu.memory_space<vmem>>, vector<8x32xbf16>
    %c0_1 = arith.constant 0 : index
    %c0_2 = arith.constant 0 : index
    %1 = vector.load %arg2[%c0_1, %c0_2] : memref<32x32xbf16, #tpu.memory_space<vmem>>, vector<32x32xbf16>
    %cst = arith.constant dense<0.000000e+00> : vector<8x32xf32>
    %2 = tpu.matmul %0, %1, %cst {dimension_numbers = #tpu.dot_dimension_numbers<[1], [0], [0], [1], [0, 0, 1, 1], [], []>} : vector<8x32xbf16>, vector<32x32xbf16>, vector<8x32xf32> -> vector<8x32xf32>
    %c0_3 = arith.constant 0 : index
    %c0_4 = arith.constant 0 : index
    %3 = vector.load %arg3[%c0_3, %c0_4] : memref<1x32xf32, #tpu.memory_space<vmem>>, vector<1x32xf32>
    %4 = vector.broadcast %3 : vector<1x32xf32> to vector<8x32xf32>
    %5 = arith.addf %2, %4 : vector<8x32xf32>
    %cst_5 = arith.constant 0.000000e+00 : f32
    %6 = vector.broadcast %cst_5 : f32 to vector<8x32xf32>
    %7 = arith.maximumf %5, %6 : vector<8x32xf32>
    %8 = arith.truncf %7 : vector<8x32xf32> to vector<8x32xbf16>
    %c0_6 = arith.constant 0 : index
    %c0_7 = arith.constant 0 : index
    %9 = vector.load %arg4[%c0_6, %c0_7] : memref<32x128xbf16, #tpu.memory_space<vmem>>, vector<32x128xbf16>
    %cst_8 = arith.constant dense<0.000000e+00> : vector<8x128xf32>
    %10 = tpu.matmul %8, %9, %cst_8 {dimension_numbers = #tpu.dot_dimension_numbers<[1], [0], [0], [1], [0, 0, 1, 1], [], []>} : vector<8x32xbf16>, vector<32x128xbf16>, vector<8x128xf32> -> vector<8x128xf32>
    %c0_9 = arith.constant 0 : index
    %c0_10 = arith.constant 0 : index
    %11 = vector.load %arg5[%c0_9, %c0_10] : memref<1x128xf32, #tpu.memory_space<vmem>>, vector<1x128xf32>
    %12 = vector.broadcast %11 : vector<1x128xf32> to vector<8x128xf32>
    %13 = arith.addf %10, %12 : vector<8x128xf32>
    %c0_11 = arith.constant 0 : index
    %c0_12 = arith.constant 0 : index
    %14 = vector.load %arg6[%c0_11, %c0_12] : memref<8x128xf32, #tpu.memory_space<vmem>>, vector<8x128xf32>
    tpu.vector_store %arg6[%c0_11, %c0_12], %13 {strides = array<i32>} : memref<8x128xf32, #tpu.memory_space<vmem>>, vector<8x128xf32>,
    return
  }
  func.func @transform_0(%arg0: i32) -> (i32, i32) {
    %c0_i32 = arith.constant 0 : i32
    %c0_i32_0 = arith.constant 0 : i32
    return %arg0, %c0_i32 : i32, i32
  }
  func.func @transform_1(%arg0: i32) -> (i32, i32) {
    %c0_i32 = arith.constant 0 : i32
    %c0_i32_0 = arith.constant 0 : i32
    %c0_i32_1 = arith.constant 0 : i32
    return %c0_i32, %c0_i32_0 : i32, i32
  }
  func.func @transform_2(%arg0: i32) -> (i32, i32) {
    %c0_i32 = arith.constant 0 : i32
    %c0_i32_0 = arith.constant 0 : i32
    %c0_i32_1 = arith.constant 0 : i32
    return %c0_i32, %c0_i32_0 : i32, i32
  }
  func.func @transform_3(%arg0: i32) -> (i32, i32) {
    %c0_i32 = arith.constant 0 : i32
    %c0_i32_0 = arith.constant 0 : i32
    %c0_i32_1 = arith.constant 0 : i32
    return %c0_i32, %c0_i32_0 : i32, i32
  }
  func.func @transform_4(%arg0: i32) -> (i32, i32) {
    %c0_i32 = arith.constant 0 : i32
    %c0_i32_0 = arith.constant 0 : i32
    %c0_i32_1 = arith.constant 0 : i32
    return %c0_i32, %c0_i32_0 : i32, i32
  }
  func.func @transform_5(%arg0: i32) -> (i32, i32) {
    %c0_i32 = arith.constant 0 : i32
    %c0_i32_0 = arith.constant 0 : i32
    return %arg0, %c0_i32 : i32, i32
  }
}

</mosaic_0001>

<llo_original>
// kernel: tpu_custom_call.1
$region0: #{tpu_custom_call.1}
  #allocation0 [shape = 'u32[]', space=smem, size = 0x4, offset = 0x4, fixed_abs, tag = 'smem constant byte address 0x4 - core index']
  #allocation1 [shape = 'u32[72,128]{1,0:T(1,128)}', space=vmem, size = 0x9000, scoped, tag = 'internal scratch']
  %s0 = inlined_call_operand.hbm [shape: bf16[8,32], index: 0, kind: input, shape index: {}]
  %s1 = inlined_call_operand.hbm [shape: bf16[32,32], index: 1, kind: input, shape index: {}]
  %s2 = inlined_call_operand.vmem [shape: f32[1,32], index: 2, kind: input, shape index: {}]
  %s3 = inlined_call_operand.hbm [shape: bf16[32,128], index: 3, kind: input, shape index: {}]
  %s4 = inlined_call_operand.vmem [shape: f32[1,128], index: 4, kind: input, shape index: {}]
  %s5 = inlined_call_operand.hbm [shape: f32[8,128], index: 5, kind: output, shape index: {}]
  %s6 = sld [smem:[#allocation0]]
  $region42: #{tpu_custom_call.1} parent=0
    _
  %s8 = ssub.s32 1, %s6
  %s9 = scalar_select 0, %s8, %s6
  $region1: #{tpu_custom_call.1} parent=0
    #allocation2 [shape = 'u8[2048]{0}', space=vmem, size = 0x800, scoped, tag = 'input window, operand 0, single buffered']
    #allocation3 [shape = 's32[1]{0}', space=sflag, size = 0x4, scoped, tag = 'scoped memory for tpu_custom_call.1']
    #allocation4 [shape = 's32[1]{0}', space=sflag, size = 0x4, scoped, tag = 'scoped memory for tpu_custom_call.1']
    #allocation5 [shape = 'u8[8192]{0}', space=vmem, size = 0x2000, scoped, tag = 'input window, operand 1, single buffered']
    #allocation6 [shape = 's32[1]{0}', space=sflag, size = 0x4, scoped, tag = 'scoped memory for tpu_custom_call.1']
    #allocation7 [shape = 'u8[8192]{0}', space=vmem, size = 0x2000, scoped, tag = 'input window, operand 3, single buffered']
    #allocation8 [shape = 'u8[4096]{0}', space=vmem, size = 0x1000, scoped, tag = 'output window, operand 0, single buffered']
    %10 = vsyncpa [#allocation3], 0
    %11 = vsyncpa [#allocation6], 0
    %12 = vsyncpa [#allocation4], 0
    // Predicated region
    $region2: #{tpu_custom_call.1} parent=1 // pred_check
      _
    $region3: #{tpu_custom_call.1} parent=1 // pred_check_branch
      %14 = sbr.rel (0) target = $region5
    $region4: #{tpu_custom_call.1} parent=1 // pred_region
      %16 = vsyncadd [#allocation3], 0
      %s18 = sshll.u32 %s0, 4
      %s19 = int_to_ptr.hbm [resolvable:$true] %s18
      %s20 = sshll.u32 [#allocation2], 4
      %s21 = int_to_ptr.vmem [resolvable:$true] %s20
      %23 = dma.hbm_to_vmem [thread:$0]  %s19, 64, %s21, [#allocation3]
    $region5: #{tpu_custom_call.1} parent=1 // pred_fallthru
      _
    // Predicated region
    $region6: #{tpu_custom_call.1} parent=1 // pred_check
      _
    $region7: #{tpu_custom_call.1} parent=1 // pred_check_branch
      %25 = sbr.rel (0) target = $region9
    $region8: #{tpu_custom_call.1} parent=1 // pred_region
      %27 = vsyncadd [#allocation6], 0
      %s28 = sshll.u32 %s1, 4
      %s29 = int_to_ptr.hbm [resolvable:$true] %s28
      %s30 = sshll.u32 [#allocation5], 4
      %s31 = int_to_ptr.vmem [resolvable:$true] %s30
      %36 = dma.hbm_to_vmem [thread:$0]  %s29, 256, %s31, [#allocation6], 64, 64, 4
    $region9: #{tpu_custom_call.1} parent=1 // pred_fallthru
      _
    // Predicated region
    $region10: #{tpu_custom_call.1} parent=1 // pred_check
      _
    $region11: #{tpu_custom_call.1} parent=1 // pred_check_branch
      %38 = sbr.rel (0) target = $region13
    $region12: #{tpu_custom_call.1} parent=1 // pred_region
      _
    $region13: #{tpu_custom_call.1} parent=1 // pred_fallthru
      _
    // Predicated region
    $region14: #{tpu_custom_call.1} parent=1 // pred_check
      _
    $region15: #{tpu_custom_call.1} parent=1 // pred_check_branch
      %40 = sbr.rel (0) target = $region17
    $region16: #{tpu_custom_call.1} parent=1 // pred_region
      %42 = vsyncadd [#allocation6], 0
      %s43 = sshll.u32 %s3, 4
      %s44 = int_to_ptr.hbm [resolvable:$true] %s43
      %s45 = sshll.u32 [#allocation7], 4
      %s46 = int_to_ptr.vmem [resolvable:$true] %s45
      %51 = dma.hbm_to_vmem [thread:$0]  %s44, 256, %s46, [#allocation6], 64, 64, 4
    $region17: #{tpu_custom_call.1} parent=1 // pred_fallthru
      _
    // Predicated region
    $region18: #{tpu_custom_call.1} parent=1 // pred_check
      _
    $region19: #{tpu_custom_call.1} parent=1 // pred_check_branch
      %53 = sbr.rel (0) target = $region21
    $region20: #{tpu_custom_call.1} parent=1 // pred_region
      _
    $region21: #{tpu_custom_call.1} parent=1 // pred_fallthru
      _
    // Predicated region
    $region22: #{tpu_custom_call.1} parent=1 // pred_check
      _
    $region23: #{tpu_custom_call.1} parent=1 // pred_check_branch
      %55 = sbr.rel (0) target = $region25
    $region24: #{tpu_custom_call.1} parent=1 // pred_region
      %57 = dma.done [#allocation3], 64
    $region25: #{tpu_custom_call.1} parent=1 // pred_fallthru
      _
    // Predicated region
    $region26: #{tpu_custom_call.1} parent=1 // pred_check
      _
    $region27: #{tpu_custom_call.1} parent=1 // pred_check_branch
      %59 = sbr.rel (0) target = $region29
    $region28: #{tpu_custom_call.1} parent=1 // pred_region
      %61 = dma.done [#allocation6], 256
    $region29: #{tpu_custom_call.1} parent=1 // pred_fallthru
      _
    // Predicated region
    $region30: #{tpu_custom_call.1} parent=1 // pred_check
      _
    $region31: #{tpu_custom_call.1} parent=1 // pred_check_branch
      %63 = sbr.rel (0) target = $region33
    $region32: #{tpu_custom_call.1} parent=1 // pred_region
      %65 = dma.done [#allocation6], 256
    $region33: #{tpu_custom_call.1} parent=1 // pred_fallthru
      _
    %v67 = vld [vmem:[#allocation2] sm:$0xf]
    %v68 = vld [vmem:[#allocation5] sm:$0xf]
    %v69 = vld [vmem:[#allocation5 + $0x4] sm:$0xf]
    %v70 = vld [vmem:[#allocation5 + $0x8] sm:$0xf]
    %v71 = vld [vmem:[#allocation5 + $0xc] sm:$0xf]
    %v72 = vld [vmem:[%s2] sm:$0x1]
    %v74 = vperm.slane %v72, 0
    %v80 = vunpack.c.l.b16 %v68
    %v81 = vunpack.c.l.b16 %v69
    %v82 = vunpack.c.l.b16 %v70
    %v83 = vunpack.c.l.b16 %v71
    %v84 = vpack.c.b16 %v81, %v80
    %v85 = vpack.c.b16 %v83, %v82
    %vm88 = vcmask 261120
    %v90 = vsel %vm88, %v67, 0
    %92 = vmatpush.bf16.msra.mxu0 0
    %93 = vmatpush.bf16.msra.mxu0 0
    %94 = vmatpush.bf16.msra.mxu0 0
    %95 = vmatpush.bf16.msra.mxu0 0
    %96 = vmatpush.bf16.msra.mxu0 0
    %97 = vmatpush.bf16.msra.mxu0 0
    %98 = vmatpush.bf16.msra.mxu0 %v85
    %99 = vmatpush.bf16.msra.mxu0 %v84
    %100 = vmatmul.bf16.gmra.mxu0 %v90
    %v101 = vpop.f32.mrf.mxu0
    %v102 = vadd.f32 %v74, %v101
    %v103 = vpop.f32.mrf.mxu0
    %104 = vdwg.mxu0
    %v105 = vmax.f32 %v102, 0.0
    %v106 = vpack.c.bf16 %v105, %v105
    %v107 = vld [vmem:[#allocation7] sm:$0xf]
    %v108 = vld [vmem:[#allocation7 + $0x4] sm:$0xf]
    %v109 = vld [vmem:[#allocation7 + $0x8] sm:$0xf]
    %v110 = vld [vmem:[#allocation7 + $0xc] sm:$0xf]
    %v111 = vld [vmem:[%s4] sm:$0x1]
    %v113 = vperm.slane %v111, 0
    %v119 = vunpack.c.l.b16 %v107
    %v120 = vunpack.c.l.b16 %v108
    %v121 = vunpack.c.l.b16 %v109
    %v122 = vunpack.c.l.b16 %v110
    %v123 = vpack.c.b16 %v120, %v119
    %v124 = vpack.c.b16 %v122, %v121
    %v128 = vsel %vm88, %v106, 0
    %130 = vmatpush.bf16.msra.mxu0 0
    %131 = vmatpush.bf16.msra.mxu0 0
    %132 = vmatpush.bf16.msra.mxu0 0
    %133 = vmatpush.bf16.msra.mxu0 0
    %134 = vmatpush.bf16.msra.mxu0 0
    %135 = vmatpush.bf16.msra.mxu0 0
    %136 = vmatpush.bf16.msra.mxu0 %v124
    %137 = vmatpush.bf16.msra.mxu0 %v123
    %138 = vmatmul.bf16.gmra.mxu0 %v128
    %v139 = vpop.f32.mrf.mxu0
    %v140 = vadd.f32 %v113, %v139
    %v141 = vpop.f32.mrf.mxu0
    %142 = vdwg.mxu0
    %143 = vst [vmem:[#allocation8] sm:$0xff] %v140
    // Predicated region
    $region34: #{tpu_custom_call.1} parent=1 // pred_check
      _
    $region35: #{tpu_custom_call.1} parent=1 // pred_check_branch
      %145 = sbr.rel (0) target = $region37
    $region36: #{tpu_custom_call.1} parent=1 // pred_region
      %147 = vsyncadd [#allocation4], 0
      %s149 = sshll.u32 [#allocation8], 4
      %s150 = int_to_ptr.vmem [resolvable:$true] %s149
      %s151 = sshll.u32 %s5, 4
      %s152 = int_to_ptr.hbm [resolvable:$true] %s151
      %154 = dma.vmem_to_hbm [thread:$0]  %s150, 128, %s152, [#allocation4]
    $region37: #{tpu_custom_call.1} parent=1 // pred_fallthru
      _
    // Predicated region
    $region38: #{tpu_custom_call.1} parent=1 // pred_check
      _
    $region39: #{tpu_custom_call.1} parent=1 // pred_check_branch
      %156 = sbr.rel (0) target = $region41
    $region40: #{tpu_custom_call.1} parent=1 // pred_region
      %158 = dma.done [#allocation4], 128
    $region41: #{tpu_custom_call.1} parent=1 // pred_fallthru
      _
    %159 = vsyncpa [#allocation3], 1
    %160 = vsyncpa [#allocation6], 1
    %161 = vsyncpa [#allocation4], 1

// kernel: tpu_custom_call.1
$region0: #{tpu_custom_call.1}
  #allocation0 [shape = 'u32[]', space=smem, size = 0x4, offset = 0x4, fixed_abs, tag = 'smem constant byte address 0x4 - core index']
  #allocation1 [shape = 'u32[72,128]{1,0:T(1,128)}', space=vmem, size = 0x9000, scoped, tag = 'internal scratch']
  %s0 = inlined_call_operand.hbm [shape: bf16[8,32], index: 0, kind: input, shape index: {}]
  %s1 = inlined_call_operand.hbm [shape: bf16[32,32], index: 1, kind: input, shape index: {}]
  %s2 = inlined_call_operand.vmem [shape: f32[1,32], index: 2, kind: input, shape index: {}]
  %s3 = inlined_call_operand.hbm [shape: bf16[32,128], index: 3, kind: input, shape index: {}]
  %s4 = inlined_call_operand.vmem [shape: f32[1,128], index: 4, kind: input, shape index: {}]
  %s5 = inlined_call_operand.hbm [shape: f32[8,128], index: 5, kind: output, shape index: {}]
  %s6 = sld [smem:[#allocation0]]
  $region42: #{tpu_custom_call.1} parent=0
    _
  %s8 = ssub.s32 1, %s6
  %s9 = scalar_select 0, %s8, %s6
  $region1: #{tpu_custom_call.1} parent=0
    #allocation2 [shape = 'u8[2048]{0}', space=vmem, size = 0x800, scoped, tag = 'input window, operand 0, single buffered']
    #allocation3 [shape = 's32[1]{0}', space=sflag, size = 0x4, scoped, tag = 'scoped memory for tpu_custom_call.1']
    #allocation4 [shape = 's32[1]{0}', space=sflag, size = 0x4, scoped, tag = 'scoped memory for tpu_custom_call.1']
    #allocation5 [shape = 'u8[8192]{0}', space=vmem, size = 0x2000, scoped, tag = 'input window, operand 1, single buffered']
    #allocation6 [shape = 's32[1]{0}', space=sflag, size = 0x4, scoped, tag = 'scoped memory for tpu_custom_call.1']
    #allocation7 [shape = 'u8[8192]{0}', space=vmem, size = 0x2000, scoped, tag = 'input window, operand 3, single buffered']
    #allocation8 [shape = 'u8[4096]{0}', space=vmem, size = 0x1000, scoped, tag = 'output window, operand 0, single buffered']
    %10 = vsyncpa [#allocation3], 0
    %11 = vsyncpa [#allocation6], 0
    %12 = vsyncpa [#allocation4], 0
    // Predicated region
    $region2: #{tpu_custom_call.1} parent=1 // pred_check
      _
    $region3: #{tpu_custom_call.1} parent=1 // pred_check_branch
      %14 = sbr.rel (0) target = $region5
    $region4: #{tpu_custom_call.1} parent=1 // pred_region
      %16 = vsyncadd [#allocation3], 0
      %s18 = sshll.u32 %s0, 4
      %s19 = int_to_ptr.hbm [resolvable:$true] %s18
      %s20 = sshll.u32 [#allocation2], 4
      %s21 = int_to_ptr.vmem [resolvable:$true] %s20
      %23 = dma.hbm_to_vmem [thread:$0]  %s19, 64, %s21, [#allocation3]
    $region5: #{tpu_custom_call.1} parent=1 // pred_fallthru
      _
    // Predicated region
    $region6: #{tpu_custom_call.1} parent=1 // pred_check
      _
    $region7: #{tpu_custom_call.1} parent=1 // pred_check_branch
      %25 = sbr.rel (0) target = $region9
    $region8: #{tpu_custom_call.1} parent=1 // pred_region
      %27 = vsyncadd [#allocation6], 0
      %s28 = sshll.u32 %s1, 4
      %s29 = int_to_ptr.hbm [resolvable:$true] %s28
      %s30 = sshll.u32 [#allocation5], 4
      %s31 = int_to_ptr.vmem [resolvable:$true] %s30
      %36 = dma.hbm_to_vmem [thread:$0]  %s29, 256, %s31, [#allocation6], 64, 64, 4
    $region9: #{tpu_custom_call.1} parent=1 // pred_fallthru
      _
    // Predicated region
    $region10: #{tpu_custom_call.1} parent=1 // pred_check
      _
    $region11: #{tpu_custom_call.1} parent=1 // pred_check_branch
      %38 = sbr.rel (0) target = $region13
    $region12: #{tpu_custom_call.1} parent=1 // pred_region
      _
    $region13: #{tpu_custom_call.1} parent=1 // pred_fallthru
      _
    // Predicated region
    $region14: #{tpu_custom_call.1} parent=1 // pred_check
      _
    $region15: #{tpu_custom_call.1} parent=1 // pred_check_branch
      %40 = sbr.rel (0) target = $region17
    $region16: #{tpu_custom_call.1} parent=1 // pred_region
      %42 = vsyncadd [#allocation6], 0
      %s43 = sshll.u32 %s3, 4
      %s44 = int_to_ptr.hbm [resolvable:$true] %s43
      %s45 = sshll.u32 [#allocation7], 4
      %s46 = int_to_ptr.vmem [resolvable:$true] %s45
      %51 = dma.hbm_to_vmem [thread:$0]  %s44, 256, %s46, [#allocation6], 64, 64, 4
    $region17: #{tpu_custom_call.1} parent=1 // pred_fallthru
      _
    // Predicated region
    $region18: #{tpu_custom_call.1} parent=1 // pred_check
      _
    $region19: #{tpu_custom_call.1} parent=1 // pred_check_branch
      %53 = sbr.rel (0) target = $region21
    $region20: #{tpu_custom_call.1} parent=1 // pred_region
      _
    $region21: #{tpu_custom_call.1} parent=1 // pred_fallthru
      _
    // Predicated region
    $region22: #{tpu_custom_call.1} parent=1 // pred_check
      _
    $region23: #{tpu_custom_call.1} parent=1 // pred_check_branch
      %55 = sbr.rel (0) target = $region25
    $region24: #{tpu_custom_call.1} parent=1 // pred_region
      %57 = dma.done [#allocation3], 64
    $region25: #{tpu_custom_call.1} parent=1 // pred_fallthru
      _
    // Predicated region
    $region26: #{tpu_custom_call.1} parent=1 // pred_check
      _
    $region27: #{tpu_custom_call.1} parent=1 // pred_check_branch
      %59 = sbr.rel (0) target = $region29
    $region28: #{tpu_custom_call.1} parent=1 // pred_region
      %61 = dma.done [#allocation6], 256
    $region29: #{tpu_custom_call.1} parent=1 // pred_fallthru
      _
    // Predicated region
    $region30: #{tpu_custom_call.1} parent=1 // pred_check
      _
    $region31: #{tpu_custom_call.1} parent=1 // pred_check_branch
      %63 = sbr.rel (0) target = $region33
    $region32: #{tpu_custom_call.1} parent=1 // pred_region
      %65 = dma.done [#allocation6], 256
    $region33: #{tpu_custom_call.1} parent=1 // pred_fallthru
      _
    %v67 = vld [vmem:[#allocation2] sm:$0xf]
    %v68 = vld [vmem:[#allocation5] sm:$0xf]
    %v69 = vld [vmem:[#allocation5 + $0x4] sm:$0xf]
    %v70 = vld [vmem:[#allocation5 + $0x8] sm:$0xf]
    %v71 = vld [vmem:[#allocation5 + $0xc] sm:$0xf]
    %v72 = vld [vmem:[%s2] sm:$0x1]
    %v74 = vperm.slane %v72, 0
    %v80 = vunpack.c.l.b16 %v68
    %v81 = vunpack.c.l.b16 %v69
    %v82 = vunpack.c.l.b16 %v70
    %v83 = vunpack.c.l.b16 %v71
    %v84 = vpack.c.b16 %v81, %v80
    %v85 = vpack.c.b16 %v83, %v82
    %vm88 = vcmask 261120
    %v90 = vsel %vm88, %v67, 0
    %92 = vmatpush.bf16.msra.mxu0 0
    %93 = vmatpush.bf16.msra.mxu0 0
    %94 = vmatpush.bf16.msra.mxu0 0
    %95 = vmatpush.bf16.msra.mxu0 0
    %96 = vmatpush.bf16.msra.mxu0 0
    %97 = vmatpush.bf16.msra.mxu0 0
    %98 = vmatpush.bf16.msra.mxu0 %v85
    %99 = vmatpush.bf16.msra.mxu0 %v84
    %100 = vmatmul.bf16.gmra.mxu0 %v90
    %v101 = vpop.f32.mrf.mxu0
    %v102 = vadd.f32 %v74, %v101
    %v103 = vpop.f32.mrf.mxu0
    %104 = vdwg.mxu0
    %v105 = vmax.f32 %v102, 0.0
    %v106 = vpack.c.bf16 %v105, %v105
    %v107 = vld [vmem:[#allocation7] sm:$0xf]
    %v108 = vld [vmem:[#allocation7 + $0x4] sm:$0xf]
    %v109 = vld [vmem:[#allocation7 + $0x8] sm:$0xf]
    %v110 = vld [vmem:[#allocation7 + $0xc] sm:$0xf]
    %v111 = vld [vmem:[%s4] sm:$0x1]
    %v113 = vperm.slane %v111, 0
    %v119 = vunpack.c.l.b16 %v107
    %v120 = vunpack.c.l.b16 %v108
    %v121 = vunpack.c.l.b16 %v109
    %v122 = vunpack.c.l.b16 %v110
    %v123 = vpack.c.b16 %v120, %v119
    %v124 = vpack.c.b16 %v122, %v121
    %v128 = vsel %vm88, %v106, 0
    %130 = vmatpush.bf16.msra.mxu0 0
    %131 = vmatpush.bf16.msra.mxu0 0
    %132 = vmatpush.bf16.msra.mxu0 0
    %133 = vmatpush.bf16.msra.mxu0 0
    %134 = vmatpush.bf16.msra.mxu0 0
    %135 = vmatpush.bf16.msra.mxu0 0
    %136 = vmatpush.bf16.msra.mxu0 %v124
    %137 = vmatpush.bf16.msra.mxu0 %v123
    %138 = vmatmul.bf16.gmra.mxu0 %v128
    %v139 = vpop.f32.mrf.mxu0
    %v140 = vadd.f32 %v113, %v139
    %v141 = vpop.f32.mrf.mxu0
    %142 = vdwg.mxu0
    %143 = vst [vmem:[#allocation8] sm:$0xff] %v140
    // Predicated region
    $region34: #{tpu_custom_call.1} parent=1 // pred_check
      _
    $region35: #{tpu_custom_call.1} parent=1 // pred_check_branch
      %145 = sbr.rel (0) target = $region37
    $region36: #{tpu_custom_call.1} parent=1 // pred_region
      %147 = vsyncadd [#allocation4], 0
      %s149 = sshll.u32 [#allocation8], 4
      %s150 = int_to_ptr.vmem [resolvable:$true] %s149
      %s151 = sshll.u32 %s5, 4
      %s152 = int_to_ptr.hbm [resolvable:$true] %s151
      %154 = dma.vmem_to_hbm [thread:$0]  %s150, 128, %s152, [#allocation4]
    $region37: #{tpu_custom_call.1} parent=1 // pred_fallthru
      _
    // Predicated region
    $region38: #{tpu_custom_call.1} parent=1 // pred_check
      _
    $region39: #{tpu_custom_call.1} parent=1 // pred_check_branch
      %156 = sbr.rel (0) target = $region41
    $region40: #{tpu_custom_call.1} parent=1 // pred_region
      %158 = dma.done [#allocation4], 128
    $region41: #{tpu_custom_call.1} parent=1 // pred_fallthru
      _
    %159 = vsyncpa [#allocation3], 1
    %160 = vsyncpa [#allocation6], 1
    %161 = vsyncpa [#allocation4], 1

</llo_original>
